<compile_context>
chip_gen: v7x
topology: tpu7x:2x2x1
jax: 0.10.0
libtpu: 0.0.40
codegen_flags: <defaults>
</compile_context>

<pallas_src>
import functools

import jax
import jax.numpy as jnp
from jax.experimental import pallas as pl
from jax.experimental.pallas import tpu as pltpu

_LANES = 128


def nested_dropout_kernel(cut_ref, x_ref, o_ref):
    """One grid step = one (tile_rows, 128) slab of one batch row.

    cut_ref: (B,) int32 per-batch cutoffs in SMEM (scalar prefetch)
    x_ref:   (tile_rows, 128) VMEM input tile
    o_ref:   (tile_rows, 128) VMEM output tile
    """
    b = pl.program_id(0)
    c = pl.program_id(1)
    tile_rows, lanes = x_ref.shape
    tile_elems = tile_rows * lanes

    cutoff = cut_ref[b]
    tile_start = c * tile_elems
    tile_end = tile_start + tile_elems

    # Tile entirely below the cutoff: plain copy.
    @pl.when(tile_end <= cutoff)
    def _():
        o_ref[...] = x_ref[...]

    # Tile entirely at/above the cutoff: store zeros (skip reading compute).
    @pl.when(tile_start >= cutoff)
    def _():
        o_ref[...] = jnp.zeros_like(o_ref)

    # Boundary tile: select on the global flattened feature index.
    @pl.when(jnp.logical_and(tile_start < cutoff, tile_end > cutoff))
    def _():
        row = jax.lax.broadcasted_iota(jnp.int32, x_ref.shape, 0)
        col = jax.lax.broadcasted_iota(jnp.int32, x_ref.shape, 1)
        idx = tile_start + row * lanes + col
        o_ref[...] = jnp.where(idx < cutoff, x_ref[...],
                               jnp.zeros_like(x_ref[...]))


def _choose_tiling(num_feats, itemsize, max_block_bytes=4 << 20):
    """Pick (tile_rows, n_chunks, padded_feats) for the (B, R, 128) layout."""
    rows = pl.cdiv(num_feats, _LANES)
    max_rows = max(8, max_block_bytes // (_LANES * itemsize))
    tile_rows = min(rows, max_rows)
    if tile_rows > 8:
        tile_rows = (tile_rows // 8) * 8          # keep sublanes full
    n_chunks = pl.cdiv(rows, tile_rows)
    padded_feats = n_chunks * tile_rows * _LANES
    return tile_rows, n_chunks, padded_feats


@functools.partial(jax.jit, static_argnames=("training", "train_only"))
def nested_dropout(x, cutoffs, *, training=True, train_only=True):
    """Pallas implementation of NestedDropout.forward.

    x:        (B, C, H, W) array
    cutoffs:  (B,) int array with values in [1, C*H*W]  (the sampled `j`s)
    """
    if not training and train_only:
        return x

    B, C, H, W = x.shape
    F = C * H * W
    itemsize = jnp.dtype(x.dtype).itemsize
    tile_rows, n_chunks, F_pad = _choose_tiling(F, itemsize)

    x_flat = x.reshape(B, F)                       # same order as torch.reshape
    if F_pad != F:
        x_flat = jnp.pad(x_flat, ((0, 0), (0, F_pad - F)))
    x3 = x_flat.reshape(B, F_pad // _LANES, _LANES)
    cut = cutoffs.astype(jnp.int32)                # (B,), lives in SMEM

    cost = pl.CostEstimate(
        flops=B * F_pad,                           # one select per element
        transcendentals=0,
        bytes_accessed=2 * B * F_pad * itemsize + B * 4,
    )

    out3 = pl.pallas_call(
        nested_dropout_kernel,
        out_shape=jax.ShapeDtypeStruct(x3.shape, x.dtype),
        grid_spec=pltpu.PrefetchScalarGridSpec(
            num_scalar_prefetch=1,
            grid=(B, n_chunks),
            in_specs=[
                pl.BlockSpec((None, tile_rows, _LANES),
                             lambda b, c, cut_ref: (b, c, 0)),
            ],
            out_specs=pl.BlockSpec((None, tile_rows, _LANES),
                                   lambda b, c, cut_ref: (b, c, 0)),
        ),
        compiler_params=pltpu.CompilerParams(
            dimension_semantics=("parallel", "parallel"),
            vmem_limit_bytes=32 << 20,
        ),
        cost_estimate=cost,
    )(cut, x3)

    out_flat = out3.reshape(B, F_pad)
    if F_pad != F:
        out_flat = out_flat[:, :F]
    return out_flat.reshape(B, C, H, W)


def nested_dropout_reference(x, cutoffs):
    """Pure-JAX reference mirroring the PyTorch loop."""
    B, C, H, W = x.shape
    F = C * H * W
    xf = x.reshape(B, F)
    idx = jnp.arange(F)[None, :]
    mask = (idx < cutoffs[:, None]).astype(x.dtype)
    return (xf * mask).reshape(B, C, H, W)


if __name__ == "__main__":
    key = jax.random.PRNGKey(0)
    k_x, k_cut = jax.random.split(key)

    B, C, H, W = 2, 4, 16, 16
    F = C * H * W

    x = jax.random.normal(k_x, (B, C, H, W), dtype=jnp.float32)
    # TODO(synk): cutoff sampling (np.random.choice over 1..F, uniform) is
    # done host-side with jax.random.randint; the kernel only applies the mask.
    cutoffs = jax.random.randint(k_cut, (B,), 1, F + 1, dtype=jnp.int32)

    # Training path (mask applied in the Pallas kernel).
    y = nested_dropout(x, cutoffs, training=True)
    y = jax.block_until_ready(y)
    y_ref = nested_dropout_reference(x, cutoffs)
    assert jnp.allclose(y, y_ref), "mismatch vs reference (boundary tiles)"

    # Exercise the fully-kept / fully-dropped pl.when branches.
    edge_cut = jnp.array([1, F], dtype=jnp.int32)
    y_edge = jax.block_until_ready(nested_dropout(x, edge_cut, training=True))
    assert jnp.allclose(y_edge, nested_dropout_reference(x, edge_cut)), \
        "mismatch vs reference (edge cutoffs)"

    # Eval path with train_only=True is the identity.
    y_eval = nested_dropout(x, cutoffs, training=False, train_only=True)
    assert jnp.allclose(y_eval, x)

    print("KERNEL_OK")
</pallas_src>

<mosaic_0001>
module attributes {stable_mosaic.version = 11 : i64} {
  func.func @nested_dropout_kernel(%arg0: i32, %arg1: i32, %arg2: memref<2xi32, #tpu.memory_space<smem>>, %arg3: memref<1x8x128xf32, #tpu.memory_space<vmem>>, %arg4: memref<1x8x128xf32, #tpu.memory_space<vmem>>) attributes {dimension_semantics = [#tpu.dimension_semantics<parallel>, #tpu.dimension_semantics<parallel>], iteration_bounds = array<i64: 2, 1>, scalar_prefetch = 1 : i64, scratch_operands = 0 : i64, tpu.core_type = #tpu.core_type<tc>, window_params = [{transform_indices = @transform_0, window_bounds = array<i64: 1, 8, 128>}, {transform_indices = @transform_1, window_bounds = array<i64: 1, 8, 128>}]} {
    %0 = arith.index_cast %arg0 : i32 to index
    %1 = memref.load %arg2[%0] : memref<2xi32, #tpu.memory_space<smem>>
    %c1024_i32 = arith.constant 1024 : i32
    %2 = arith.muli %arg1, %c1024_i32 : i32
    %c1024_i32_0 = arith.constant 1024 : i32
    %3 = arith.addi %2, %c1024_i32_0 : i32
    %4 = arith.cmpi sle, %3, %1 : i32
    %5 = arith.extui %4 : i1 to i32
    %c0_i32 = arith.constant 0 : i32
    %6 = arith.cmpi ne, %5, %c0_i32 : i32
    scf.if %6 {
      %c0 = arith.constant 0 : index
      %c0_3 = arith.constant 0 : index
      %c0_4 = arith.constant 0 : index
      %15 = vector.load %arg3[%c0, %c0_3, %c0_4] : memref<1x8x128xf32, #tpu.memory_space<vmem>>, vector<1x8x128xf32>
      %16 = vector.shape_cast %15 : vector<1x8x128xf32> to vector<8x128xf32>
      %c0_5 = arith.constant 0 : index
      %c0_6 = arith.constant 0 : index
      %c0_7 = arith.constant 0 : index
      %17 = vector.load %arg4[%c0_5, %c0_6, %c0_7] : memref<1x8x128xf32, #tpu.memory_space<vmem>>, vector<1x8x128xf32>
      %18 = vector.shape_cast %17 : vector<1x8x128xf32> to vector<8x128xf32>
      %19 = vector.shape_cast %16 : vector<8x128xf32> to vector<1x8x128xf32>
      tpu.vector_store %arg4[%c0_5, %c0_6, %c0_7], %19 {strides = array<i32>} : memref<1x8x128xf32, #tpu.memory_space<vmem>>, vector<1x8x128xf32>,
    } else {
    }
    %7 = arith.cmpi sge, %2, %1 : i32
    %8 = arith.extui %7 : i1 to i32
    %c0_i32_1 = arith.constant 0 : i32
    %9 = arith.cmpi ne, %8, %c0_i32_1 : i32
    scf.if %9 {
      %cst = arith.constant 0.000000e+00 : f32
      %15 = vector.broadcast %cst : f32 to vector<8x128xf32>
      %c0 = arith.constant 0 : index
      %c0_3 = arith.constant 0 : index
      %c0_4 = arith.constant 0 : index
      %16 = vector.load %arg4[%c0, %c0_3, %c0_4] : memref<1x8x128xf32, #tpu.memory_space<vmem>>, vector<1x8x128xf32>
      %17 = vector.shape_cast %16 : vector<1x8x128xf32> to vector<8x128xf32>
      %18 = vector.shape_cast %15 : vector<8x128xf32> to vector<1x8x128xf32>
      tpu.vector_store %arg4[%c0, %c0_3, %c0_4], %18 {strides = array<i32>} : memref<1x8x128xf32, #tpu.memory_space<vmem>>, vector<1x8x128xf32>,
    } else {
    }
    %10 = arith.cmpi slt, %2, %1 : i32
    %11 = arith.cmpi sgt, %3, %1 : i32
    %12 = arith.andi %10, %11 : i1
    %13 = arith.extui %12 : i1 to i32
    %c0_i32_2 = arith.constant 0 : i32
    %14 = arith.cmpi ne, %13, %c0_i32_2 : i32
    scf.if %14 {
      %15 = tpu.iota {dimensions = array<i32: 0>} : vector<8x128xi32>
      %16 = tpu.iota {dimensions = array<i32: 1>} : vector<8x128xi32>
      %c128_i32 = arith.constant 128 : i32
      %17 = vector.broadcast %c128_i32 : i32 to vector<8x128xi32>
      %18 = arith.muli %15, %17 : vector<8x128xi32>
      %19 = vector.broadcast %2 : i32 to vector<8x128xi32>
      %20 = arith.addi %19, %18 : vector<8x128xi32>
      %21 = arith.addi %20, %16 : vector<8x128xi32>
      %22 = vector.broadcast %1 : i32 to vector<8x128xi32>
      %23 = arith.cmpi slt, %21, %22 : vector<8x128xi32>
      %c0 = arith.constant 0 : index
      %c0_3 = arith.constant 0 : index
      %c0_4 = arith.constant 0 : index
      %24 = vector.load %arg3[%c0, %c0_3, %c0_4] : memref<1x8x128xf32, #tpu.memory_space<vmem>>, vector<1x8x128xf32>
      %25 = vector.shape_cast %24 : vector<1x8x128xf32> to vector<8x128xf32>
      %cst = arith.constant 0.000000e+00 : f32
      %26 = vector.broadcast %cst : f32 to vector<8x128xf32>
      %27 = arith.select %23, %25, %26 : vector<8x128xi1>, vector<8x128xf32>
      %c0_5 = arith.constant 0 : index
      %c0_6 = arith.constant 0 : index
      %c0_7 = arith.constant 0 : index
      %28 = vector.load %arg4[%c0_5, %c0_6, %c0_7] : memref<1x8x128xf32, #tpu.memory_space<vmem>>, vector<1x8x128xf32>
      %29 = vector.shape_cast %28 : vector<1x8x128xf32> to vector<8x128xf32>
      %30 = vector.shape_cast %27 : vector<8x128xf32> to vector<1x8x128xf32>
      tpu.vector_store %arg4[%c0_5, %c0_6, %c0_7], %30 {strides = array<i32>} : memref<1x8x128xf32, #tpu.memory_space<vmem>>, vector<1x8x128xf32>,
    } else {
    }
    return
  }
  func.func @transform_0(%arg0: i32, %arg1: i32, %arg2: memref<2xi32, #tpu.memory_space<smem>>) -> (i32, i32, i32) {
    %c0_i32 = arith.constant 0 : i32
    %c0_i32_0 = arith.constant 0 : i32
    return %arg0, %arg1, %c0_i32 : i32, i32, i32
  }
  func.func @transform_1(%arg0: i32, %arg1: i32, %arg2: memref<2xi32, #tpu.memory_space<smem>>) -> (i32, i32, i32) {
    %c0_i32 = arith.constant 0 : i32
    %c0_i32_0 = arith.constant 0 : i32
    return %arg0, %arg1, %c0_i32 : i32, i32, i32
  }
}

</mosaic_0001>

<llo_original>
// kernel: nested_dropout.1
$region0: #{nested_dropout.1}
  #allocation0 [shape = 'u32[]', space=smem, size = 0x4, offset = 0x4, fixed_abs, tag = 'smem constant byte address 0x4 - core index']
  #allocation1 [shape = 'u32[144,128]{1,0:T(1,128)}', space=vmem, size = 0x12000, scoped, tag = 'internal scratch']
  #allocation2 [shape = 's32[1]{0}', space=sflag, size = 0x4, scoped, tag = 'scoped memory for nested_dropout.1']
  #allocation3 [shape = 'u8[512]{0}', space=smem, size = 0x200, scoped, tag = 'prefetched SMEM operand 0']
  %s0 = inlined_call_operand.vmem [shape: s32[2], index: 0, kind: input, shape index: {}]
  %s1 = inlined_call_operand.vmem [shape: f32[2,8,128], index: 1, kind: input, shape index: {}]
  %s2 = inlined_call_operand.vmem [shape: f32[2,8,128], index: 2, kind: output, shape index: {}]
  %s3 = sld [smem:[#allocation0]]
  $region49: #{nested_dropout.1} parent=0
    _
  %s5 = ssub.s32 1, %s3
  %s6 = scalar_select 0, %s5, %s3
  %s7 = sshll.u32 %s0, 4
  %s8 = int_to_ptr.vmem [resolvable:$true] %s7
  %10 = dma.vmem_to_smem %s8, 16, [#allocation3], [#allocation2]
  %11 = dma.done [#allocation2], 16
  %12 = sfence
  loop: start=0, step=1, limit=4
  $region2: #{nested_dropout.1} parent=0 // loop_pre_header
    _
  $region3: #{nested_dropout.1} parent=0 // loop_header
    %s14 = sphi 0, %s18
    %p15 = scmp.ge.s32.totalorder %s14, 4
    %s21 = sphi 0, %s33
    %s22 = sphi 0, %s29
    %s23 = sphi 0, %s21
    %s24 = sphi 0, %s22
    %s25 = sphi 0, %s23
    %s26 = sphi 0, %s24
    %s38 = sphi 0, %s40
    %s41 = sphi 0, %s38
    %s42 = sphi 0, %s41
    %s58 = sphi 0, %s42
    %s66 = sphi 0, %s68
    %s69 = sphi 0, %s66
    %s70 = sphi 0, %s69
    %s86 = sphi 0, %s70
  $region4: #{nested_dropout.1} parent=0 // loop_header_branch
    %17 = sbr.rel (%p15) target = $region8
  $region5: #{nested_dropout.1} parent=0 // loop_body
    %s19 = ssub.s32 %s14, 1
    %s20 = ssub.s32 %s14, 2
    %s27 = sadd.s32 1, %s22
    %p28 = scmp.ge.s32.totalorder %s27, 1
    %s29 = scalar_select %p28, 0, %s27
    %s30 = sadd.s32 1, %s21
    %s31 = scalar_select %p28, %s30, %s21
    %p32 = scmp.ge.s32.totalorder %s31, 2
    %s33 = scalar_select %p32, 0, %s31
    %s34 = ssub.s32 %s21, %s33
    %s35 = ssub.s32 %s22, %s29
    %s36 = sor.u32 %s34, %s35
    %p37 = scmp.eq.s32.totalorder %s36, 0
    %s39 = sadd.s32 %s38, 1
    %s40 = scalar_select %p37, %s38, %s39
    %p43 = pneg %p37
    %p44 = scmp.eq.s32.totalorder %s14, 1
    %p45 = por %p43, %p44
    %p46 = scmp.ne.s32.totalorder %s38, %s41
    %p47 = scmp.eq.s32.totalorder %s14, 0
    %p48 = por %p46, %p47
    %p49 = scmp.ne.s32.totalorder %s38, %s41
    %p50 = scmp.eq.s32.totalorder %s19, 1
    %p51 = por %p49, %p50
    %p52 = scmp.ne.s32.totalorder %s41, %s42
    %p53 = scmp.eq.s32.totalorder %s19, 0
    %p54 = por %p52, %p53
    %p55 = scmp.ne.s32.totalorder %s41, %s42
    %p56 = scmp.eq.s32.totalorder %s20, 1
    %p57 = por %p55, %p56
    %p59 = scmp.ne.s32.totalorder %s42, %s58
    %p60 = scmp.eq.s32.totalorder %s20, 0
    %p61 = por %p59, %p60
    %s62 = ssub.s32 %s21, %s33
    %s63 = ssub.s32 %s22, %s29
    %s64 = sor.u32 %s62, %s63
    %p65 = scmp.eq.s32.totalorder %s64, 0
    %s67 = sadd.s32 %s66, 1
    %s68 = scalar_select %p65, %s66, %s67
    %p71 = pneg %p65
    %p72 = scmp.eq.s32.totalorder %s14, 1
    %p73 = por %p71, %p72
    %p74 = scmp.ne.s32.totalorder %s66, %s69
    %p75 = scmp.eq.s32.totalorder %s14, 0
    %p76 = por %p74, %p75
    %p77 = scmp.ne.s32.totalorder %s66, %s69
    %p78 = scmp.eq.s32.totalorder %s19, 1
    %p79 = por %p77, %p78
    %p80 = scmp.ne.s32.totalorder %s69, %s70
    %p81 = scmp.eq.s32.totalorder %s19, 0
    %p82 = por %p80, %p81
    %p83 = scmp.ne.s32.totalorder %s69, %s70
    %p84 = scmp.eq.s32.totalorder %s20, 1
    %p85 = por %p83, %p84
    %p87 = scmp.ne.s32.totalorder %s70, %s86
    %p88 = scmp.eq.s32.totalorder %s20, 0
    %p89 = por %p87, %p88
    %p90 = scmp.le.s32.totalorder 1, %s14
    %p91 = scmp.lt.s32.totalorder %s14, 3
    %p92 = pnand %p90, %p91
    %p93 = pneg %p92
    // Predicated region
    $region9: #{nested_dropout.1} parent=5 // pred_check
      _
    $region10: #{nested_dropout.1} parent=5 // pred_check_branch
      %95 = sbr.rel (%p92) target = $region12
    $region11: #{nested_dropout.1} parent=5 // pred_region
      %s96 = ssub.s32 %s14, 1
    $region12: #{nested_dropout.1} parent=5 // pred_fallthru
      _
    %p97 = scmp.lt.s32.totalorder %s14, 2
    // Predicated region
    $region13: #{nested_dropout.1} parent=5 // pred_check
      %p98 = pneg %p97
    $region14: #{nested_dropout.1} parent=5 // pred_check_branch
      %100 = sbr.rel (%p98) target = $region16
    $region15: #{nested_dropout.1} parent=5 // pred_region
      // Predicated region
      $region17: #{nested_dropout.1} parent=15 // pred_check
        %p101 = pneg %p48
      $region18: #{nested_dropout.1} parent=15 // pred_check_branch
        %103 = sbr.rel (%p101) target = $region20
      $region19: #{nested_dropout.1} parent=15 // pred_region
        %p104 = scmp.lt.s32.totalorder %s21, 1
        %s105 = scalar_select %p104, %s21, 1
        %p106 = scmp.lt.s32.totalorder %s22, 0
        %s107 = scalar_select %p106, %s22, 0
        %s108 = sadd.s32 %s107, %s105
        %s109 = smul.addr %s108, 8
        %s110 = scalar_lea.vmem %s1, %s109
      $region20: #{nested_dropout.1} parent=15 // pred_fallthru
        _
    $region16: #{nested_dropout.1} parent=5 // pred_fallthru
      _
    %p111 = scmp.le.s32.totalorder 1, %s14
    %p112 = scmp.lt.s32.totalorder %s14, 3
    %p113 = pnand %p111, %p112
    %p114 = pneg %p113
    // Predicated region
    $region21: #{nested_dropout.1} parent=5 // pred_check
      _
    $region22: #{nested_dropout.1} parent=5 // pred_check_branch
      %116 = sbr.rel (%p113) target = $region24
    $region23: #{nested_dropout.1} parent=5 // pred_region
      %s117 = ssub.s32 %s14, 1
      %p118 = scmp.lt.s32.totalorder %s23, 1
      %s119 = scalar_select %p118, %s23, 1
      %p120 = scmp.lt.s32.totalorder %s24, 0
      %s121 = scalar_select %p120, %s24, 0
      %s122 = sadd.s32 %s121, %s119
      %s123 = smul.addr %s122, 8
      %s124 = scalar_lea.vmem %s1, %s123
      %p125 = pneg %p54
      %p126 = pneg %p51
      %p127 = pneg %p82
      %p128 = pneg %p79
      %p129 = scmp.lt.s32.totalorder %s23, 1
      %s130 = scalar_select %p129, %s23, 1
      %p131 = scmp.lt.s32.totalorder %s24, 0
      %s132 = scalar_select %p131, %s24, 0
      %s133 = sadd.s32 %s132, %s130
      %s134 = smul.addr %s133, 8
      %s135 = scalar_lea.vmem %s2, %s134
      %p136 = scmp.lt.s32.totalorder %s23, 1
      %s137 = scalar_select %p136, %s23, 1
      %p138 = scmp.lt.s32.totalorder %s24, 0
      %s139 = scalar_select %p138, %s24, 0
      %s140 = sadd.s32 %s139, %s137
      %s141 = smul.addr %s140, 8
      %s142 = scalar_lea.vmem %s1, %s141
      %p143 = scmp.lt.s32.totalorder %s23, 1
      %s144 = scalar_select %p143, %s23, 1
      %p145 = scmp.lt.s32.totalorder %s24, 0
      %s146 = scalar_select %p145, %s24, 0
      %s147 = sadd.s32 %s146, %s144
      %s148 = smul.addr %s147, 8
      %s149 = scalar_lea.vmem %s2, %s148
      %s150 = sld [smem:[#allocation3 + %s23]]
      %s151 = smul.u32 %s24, 1024
      %s152 = sadd.s32 %s151, 1024
      %p153 = scmp.le.s32.totalorder %s152, %s150
      // Predicated region
      $region25: #{nested_dropout.1} parent=23 // pred_check
        %p154 = pneg %p153
      $region26: #{nested_dropout.1} parent=23 // pred_check_branch
        %156 = sbr.rel (%p154) target = $region28
      $region27: #{nested_dropout.1} parent=23 // pred_region
        %v157 = vld [vmem:[%s142] sm:$0xff]
        %158 = vst [vmem:[%s149] sm:$0xff] %v157
      $region28: #{nested_dropout.1} parent=23 // pred_fallthru
        _
      %p159 = scmp.ge.s32.totalorder %s151, %s150
      // Predicated region
      $region29: #{nested_dropout.1} parent=23 // pred_check
        %p160 = pneg %p159
      $region30: #{nested_dropout.1} parent=23 // pred_check_branch
        %162 = sbr.rel (%p160) target = $region32
      $region31: #{nested_dropout.1} parent=23 // pred_region
        %163 = vst [vmem:[%s149] sm:$0xff] 0.0
      $region32: #{nested_dropout.1} parent=23 // pred_fallthru
        _
      %p164 = scmp.lt.s32.totalorder %s151, %s150
      %p165 = scmp.gt.s32.totalorder %s152, %s150
      %p166 = pnand %p164, %p165
      %p167 = pneg %p166
      // Predicated region
      $region33: #{nested_dropout.1} parent=23 // pred_check
        _
      $region34: #{nested_dropout.1} parent=23 // pred_check_branch
        %169 = sbr.rel (%p166) target = $region36
      $region35: #{nested_dropout.1} parent=23 // pred_region
        %v170 = vlaneseq
        %v171 = vshrl.u32 %v170, 7
        %v172 = vlaneseq
        %v173 = vand.u32 %v172, 127
        %v174 = vmul.u32 %v171, 128
        %v175 = vstv %s151
        %v176 = vadd.s32 %v175, %v174
        %v177 = vadd.s32 %v176, %v173
        %v178 = vstv %s150
        %vm179 = vcmp.lt.s32.totalorder %v177, %v178
        %v180 = vld [vmem:[%s142] sm:$0xff]
        %v181 = vsel %vm179, %v180, 0.0
        %182 = vst [vmem:[%s149] sm:$0xff] %v181
      $region36: #{nested_dropout.1} parent=23 // pred_fallthru
        _
      %p183 = scmp.lt.s32.totalorder %s23, 1
      %s184 = scalar_select %p183, %s23, 1
      %p185 = scmp.lt.s32.totalorder %s24, 0
      %s186 = scalar_select %p185, %s24, 0
      %s187 = sadd.s32 %s186, %s184
      %s188 = smul.addr %s187, 8
      %s189 = scalar_lea.vmem %s2, %s188
      // Predicated region
      $region37: #{nested_dropout.1} parent=23 // pred_check
        %p190 = pneg %p79
      $region38: #{nested_dropout.1} parent=23 // pred_check_branch
        %192 = sbr.rel (%p190) target = $region40
      $region39: #{nested_dropout.1} parent=23 // pred_region
        _
      $region40: #{nested_dropout.1} parent=23 // pred_fallthru
        _
    $region24: #{nested_dropout.1} parent=5 // pred_fallthru
      _
    %p193 = scmp.le.s32.totalorder 2, %s14
    // Predicated region
    $region41: #{nested_dropout.1} parent=5 // pred_check
      %p194 = pneg %p193
    $region42: #{nested_dropout.1} parent=5 // pred_check_branch
      %196 = sbr.rel (%p194) target = $region44
    $region43: #{nested_dropout.1} parent=5 // pred_region
      %s197 = ssub.s32 %s14, 2
      // Predicated region
      $region45: #{nested_dropout.1} parent=43 // pred_check
        %p198 = pneg %p85
      $region46: #{nested_dropout.1} parent=43 // pred_check_branch
        %200 = sbr.rel (%p198) target = $region48
      $region47: #{nested_dropout.1} parent=43 // pred_region
        %p201 = scmp.lt.s32.totalorder %s25, 1
        %s202 = scalar_select %p201, %s25, 1
        %p203 = scmp.lt.s32.totalorder %s26, 0
        %s204 = scalar_select %p203, %s26, 0
        %s205 = sadd.s32 %s204, %s202
        %s206 = smul.addr %s205, 8
        %s207 = scalar_lea.vmem %s2, %s206
      $region48: #{nested_dropout.1} parent=43 // pred_fallthru
        _
    $region44: #{nested_dropout.1} parent=5 // pred_fallthru
      _
  $region6: #{nested_dropout.1} parent=0 // loop_footer
    %s18 = sadd.s32 1, %s14
  $region7: #{nested_dropout.1} parent=0 // loop_footer_branch
    %13 = sbr.rel target = $region3
  $region8: #{nested_dropout.1} parent=0 // loop_exit
    _

</llo_original>
